<compile_context>
chip_gen: v7x
topology: tpu7x:2x2x1
jax: 0.10.0
libtpu: 0.0.40
codegen_flags: <defaults>
</compile_context>

<pallas_src>
import jax
import jax.numpy as jnp
from jax import lax
from jax.experimental import pallas as pl
from jax.experimental.pallas import tpu as pltpu


def _sigmoid(x):
    # exp-based sigmoid: guaranteed Mosaic lowering (EUP exp + VPU div);
    # identical formulation in the pure-JAX reference.
    return 1.0 / (1.0 + jnp.exp(-x))


def _row_tile(rows):
    """Largest row tile (multiple of 8, <=2048) that divides `rows`."""
    for tr in (2048, 1024, 512, 256, 128, 64, 32, 16, 8):
        if rows % tr == 0:
            return tr
    return rows  # non-divisible fallback: single full-extent block


# ---------------------------------------------------------------------------
# Kernel 1: layer-0 time-batched input projection  xg0 = x @ W_ih^T + bias
# ---------------------------------------------------------------------------
def _in_proj_kernel(x_ref, w_ref, b_ref, o_ref):
    o_ref[...] = (
        jnp.dot(x_ref[...], w_ref[...], preferred_element_type=jnp.float32)
        + b_ref[...]
    )


# ---------------------------------------------------------------------------
# Kernel 2: fused whole-stack LSTM recurrence (all layers, all timesteps)
# ---------------------------------------------------------------------------
def _stack_kernel(xg0_ref, wih_ref, whh_ref, bias_ref, y_ref,
                  hseq_ref, xg_ref, h_ref, c_ref):
    # xg0_ref : (T, B, 4H)  layer-0 input projection (biases already folded in)
    # wih_ref : (max(L-1,1), H, 4H)  W_ih^T for layers 1..L-1 (VMEM-resident)
    # whh_ref : (L, H, 4H)           W_hh^T for all layers   (VMEM-resident)
    # bias_ref: (max(L-1,1), 1, 4H)  b_ih + b_hh for layers 1..L-1
    # y_ref   : (T, B, H)   output = last layer's h sequence
    # hseq_ref: VMEM (T, B, H)   current layer's h sequence
    # xg_ref  : VMEM (T, B, 4H)  current layer's input projection
    # h_ref, c_ref: VMEM (B, H)  recurrent state
    T, B, H4 = xg0_ref.shape
    L = whh_ref.shape[0]
    H = whh_ref.shape[1]
    unroll_t = T <= 32  # fully unroll short time loops for LLO visibility

    def recurrence(xg_src_ref, whh):
        # whh: (H, 4H) value held in vregs across the (unrolled) time loop.
        h_ref[...] = jnp.zeros_like(h_ref)
        c_ref[...] = jnp.zeros_like(c_ref)

        def step(t, carry):
            gates = xg_src_ref[t] + jnp.dot(
                h_ref[...], whh, preferred_element_type=jnp.float32)
            # Two full-lane transcendental passes instead of four sliced ones.
            sig = _sigmoid(gates)
            tg = jnp.tanh(gates)
            i = sig[:, 0:H]
            f = sig[:, H:2 * H]
            g = tg[:, 2 * H:3 * H]
            o = sig[:, 3 * H:4 * H]
            c_new = f * c_ref[...] + i * g
            h_new = o * jnp.tanh(c_new)
            c_ref[...] = c_new
            h_ref[...] = h_new
            hseq_ref[t] = h_new
            return carry

        lax.fori_loop(0, T, step, 0, unroll=unroll_t)

    # ---- layer 0: uses the precomputed (kernel-1) input projection ---------
    recurrence(xg0_ref, whh_ref[0])

    # ---- layers 1..L-1: projection computed in-kernel from resident hseq ---
    def layer_body(l, carry):
        wih = wih_ref[l - 1]            # (H, 4H)
        b = bias_ref[l - 1]             # (1, 4H)
        hs = hseq_ref[...].reshape(T * B, H)
        xg_ref[...] = (
            jnp.dot(hs, wih, preferred_element_type=jnp.float32) + b
        ).reshape(T, B, H4)
        recurrence(xg_ref, whh_ref[l])
        return carry

    lax.fori_loop(1, L, layer_body, 0)

    # Single slab writeback of the last layer's h sequence.
    # TODO(synk): H=32 < 128 lanes -> masked store; pad/pack H for lane density
    #             at scale (one DMA either way with this fused structure).
    y_ref[...] = hseq_ref[...].astype(y_ref.dtype)


# ---------------------------------------------------------------------------
# Wrapper
# ---------------------------------------------------------------------------
def prepare_params(params):
    """Pre-transpose / stack the PyTorch-layout weights ONCE (hoisted out of
    the forward path). params: list of (w_ih, w_hh, b_ih, b_hh) per layer."""
    w_ih0, _, b_ih0, b_hh0 = params[0]
    H4, _ = w_ih0.shape
    H = H4 // 4
    L = len(params)

    w_ih0_t = jnp.transpose(w_ih0).astype(jnp.float32)          # (D, 4H)
    bias0 = (b_ih0 + b_hh0).reshape(1, H4).astype(jnp.float32)  # (1, 4H)
    whh_t = jnp.stack(
        [jnp.transpose(p[1]).astype(jnp.float32) for p in params])  # (L,H,4H)
    if L > 1:
        wih_t = jnp.stack(
            [jnp.transpose(p[0]).astype(jnp.float32) for p in params[1:]])
        biases = jnp.stack(
            [(p[2] + p[3]).reshape(1, H4).astype(jnp.float32)
             for p in params[1:]])
    else:  # dummies (never read: the layer loop runs 0 iterations)
        wih_t = jnp.zeros((1, H, H4), jnp.float32)
        biases = jnp.zeros((1, 1, H4), jnp.float32)

    return dict(w_ih0_t=w_ih0_t, bias0=bias0, whh_t=whh_t, wih_t=wih_t,
                biases=biases, hidden_dim=H, num_layers=L)


def lstm_temporal_feature_extractor(x, prepared):
    """x: (T, B, input_dim) float32 (batch_first=False). Returns (T, B, H)."""
    T, B, D = x.shape
    H = prepared["hidden_dim"]
    L = prepared["num_layers"]
    H4 = 4 * H
    wih_t = prepared["wih_t"]
    whh_t = prepared["whh_t"]
    biases = prepared["biases"]
    Lw = wih_t.shape[0]

    # --- 1) layer-0 time-batched input projection (lane-dense 4H columns) ---
    R = T * B
    TR = _row_tile(R)
    xg0 = pl.pallas_call(
        _in_proj_kernel,
        out_shape=jax.ShapeDtypeStruct((R, H4), jnp.float32),
        grid=(R // TR,),
        in_specs=[
            pl.BlockSpec((TR, D), lambda i: (i, 0)),
            pl.BlockSpec((D, H4), lambda i: (0, 0)),   # resident weights
            pl.BlockSpec((1, H4), lambda i: (0, 0)),   # resident bias
        ],
        out_specs=pl.BlockSpec((TR, H4), lambda i: (i, 0)),
        compiler_params=pltpu.CompilerParams(
            dimension_semantics=("parallel",),
            vmem_limit_bytes=32 * 1024 * 1024,
        ),
    )(x.reshape(R, D), prepared["w_ih0_t"], prepared["bias0"])
    xg0 = xg0.reshape(T, B, H4)

    # --- 2) fused whole-stack recurrence (one launch for all layers) --------
    y = pl.pallas_call(
        _stack_kernel,
        out_shape=jax.ShapeDtypeStruct((T, B, H), jnp.float32),
        grid=(1,),
        in_specs=[
            pl.BlockSpec((T, B, H4), lambda i: (0, 0, 0)),
            pl.BlockSpec((Lw, H, H4), lambda i: (0, 0, 0)),   # resident W_ih^T
            pl.BlockSpec((L, H, H4), lambda i: (0, 0, 0)),    # resident W_hh^T
            pl.BlockSpec((Lw, 1, H4), lambda i: (0, 0, 0)),   # resident biases
        ],
        out_specs=pl.BlockSpec((T, B, H), lambda i: (0, 0, 0)),
        scratch_shapes=[
            pltpu.VMEM((T, B, H), jnp.float32),    # h sequence of current layer
            pltpu.VMEM((T, B, H4), jnp.float32),   # current layer's xg
            pltpu.VMEM((B, H), jnp.float32),       # h state
            pltpu.VMEM((B, H), jnp.float32),       # c state
        ],
        compiler_params=pltpu.CompilerParams(
            dimension_semantics=("arbitrary",),
            vmem_limit_bytes=32 * 1024 * 1024,
        ),
    )(xg0, wih_t, whh_t, biases)
    return y


# ---------------------------------------------------------------------------
# Pure-JAX reference (same math as torch.nn.LSTM forward) for correctness.
# ---------------------------------------------------------------------------
def _lstm_ref(x, params):
    def layer(xs, w_ih, w_hh, b_ih, b_hh):
        B = xs.shape[1]
        H = w_hh.shape[1]

        def step(carry, x_t):
            h, c = carry
            gates = x_t @ w_ih.T + b_ih + h @ w_hh.T + b_hh
            i, f, g, o = jnp.split(gates, 4, axis=-1)
            i = _sigmoid(i)
            f = _sigmoid(f)
            g = jnp.tanh(g)
            o = _sigmoid(o)
            c = f * c + i * g
            h = o * jnp.tanh(c)
            return (h, c), h

        h0 = jnp.zeros((B, H), jnp.float32)
        c0 = jnp.zeros((B, H), jnp.float32)
        _, ys = jax.lax.scan(step, (h0, c0), xs)
        return ys

    out = x
    for (w_ih, w_hh, b_ih, b_hh) in params:
        out = layer(out, w_ih, w_hh, b_ih, b_hh)
    return out


if __name__ == "__main__":
    # Small shapes consistent with the module: seq=8, batch=2, input_dim=16,
    # hidden=32. num_layers kept small (4) for the demo; the fused kernel's
    # layer loop handles any depth (PyTorch default is 50). bidirectional=False.
    T, B, D_IN, H, NUM_LAYERS = 8, 2, 16, 32, 4

    key = jax.random.PRNGKey(0)
    keys = jax.random.split(key, 1 + 4 * NUM_LAYERS)
    x = jax.random.normal(keys[0], (T, B, D_IN), dtype=jnp.float32)

    scale = 1.0 / (H ** 0.5)
    params = []
    d = D_IN
    k = 1
    for _ in range(NUM_LAYERS):
        w_ih = jax.random.uniform(keys[k], (4 * H, d), jnp.float32, -scale, scale); k += 1
        w_hh = jax.random.uniform(keys[k], (4 * H, H), jnp.float32, -scale, scale); k += 1
        b_ih = jax.random.uniform(keys[k], (4 * H,), jnp.float32, -scale, scale); k += 1
        b_hh = jax.random.uniform(keys[k], (4 * H,), jnp.float32, -scale, scale); k += 1
        params.append((w_ih, w_hh, b_ih, b_hh))
        d = H

    prepared = prepare_params(params)     # one-time weight transpose/stack
    out = lstm_temporal_feature_extractor(x, prepared)
    out = jax.block_until_ready(out)

    ref = _lstm_ref(x, params)
    assert out.shape == (T, B, H), out.shape
    assert jnp.allclose(out, ref, atol=1e-4, rtol=1e-4), "mismatch vs reference"
    print("KERNEL_OK")
</pallas_src>

<mosaic_0001>
module attributes {stable_mosaic.version = 11 : i64} {
  func.func @_in_proj_kernel(%arg0: i32, %arg1: memref<16x16xf32, #tpu.memory_space<vmem>>, %arg2: memref<16x128xf32, #tpu.memory_space<vmem>>, %arg3: memref<1x128xf32, #tpu.memory_space<vmem>>, %arg4: memref<16x128xf32, #tpu.memory_space<vmem>>) attributes {dimension_semantics = [#tpu.dimension_semantics<parallel>], iteration_bounds = array<i64: 1>, scalar_prefetch = 0 : i64, scratch_operands = 0 : i64, tpu.core_type = #tpu.core_type<tc>, window_params = [{transform_indices = @transform_0, window_bounds = array<i64: 16, 16>}, {pipeline_mode = #tpu.pipeline_mode<synchronous>, transform_indices = @transform_1, window_bounds = array<i64: 16, 128>}, {pipeline_mode = #tpu.pipeline_mode<synchronous>, transform_indices = @transform_2, window_bounds = array<i64: 1, 128>}, {transform_indices = @transform_3, window_bounds = array<i64: 16, 128>}]} {
    %c0 = arith.constant 0 : index
    %c0_0 = arith.constant 0 : index
    %0 = vector.load %arg1[%c0, %c0_0] : memref<16x16xf32, #tpu.memory_space<vmem>>, vector<16x16xf32>
    %c0_1 = arith.constant 0 : index
    %c0_2 = arith.constant 0 : index
    %1 = vector.load %arg2[%c0_1, %c0_2] : memref<16x128xf32, #tpu.memory_space<vmem>>, vector<16x128xf32>
    %cst = arith.constant dense<0.000000e+00> : vector<16x128xf32>
    %2 = tpu.matmul %0, %1, %cst {dimension_numbers = #tpu.dot_dimension_numbers<[1], [0], [0], [1], [0, 0, 1, 1], [], []>} : vector<16x16xf32>, vector<16x128xf32>, vector<16x128xf32> -> vector<16x128xf32>
    %c0_3 = arith.constant 0 : index
    %c0_4 = arith.constant 0 : index
    %3 = vector.load %arg3[%c0_3, %c0_4] : memref<1x128xf32, #tpu.memory_space<vmem>>, vector<1x128xf32>
    %4 = vector.broadcast %3 : vector<1x128xf32> to vector<16x128xf32>
    %5 = arith.addf %2, %4 : vector<16x128xf32>
    %c0_5 = arith.constant 0 : index
    %c0_6 = arith.constant 0 : index
    %6 = vector.load %arg4[%c0_5, %c0_6] : memref<16x128xf32, #tpu.memory_space<vmem>>, vector<16x128xf32>
    tpu.vector_store %arg4[%c0_5, %c0_6], %5 {strides = array<i32>} : memref<16x128xf32, #tpu.memory_space<vmem>>, vector<16x128xf32>,
    return
  }
  func.func @transform_0(%arg0: i32) -> (i32, i32) {
    %c0_i32 = arith.constant 0 : i32
    %c0_i32_0 = arith.constant 0 : i32
    return %arg0, %c0_i32 : i32, i32
  }
  func.func @transform_1(%arg0: i32) -> (i32, i32) {
    %c0_i32 = arith.constant 0 : i32
    %c0_i32_0 = arith.constant 0 : i32
    %c0_i32_1 = arith.constant 0 : i32
    return %c0_i32, %c0_i32_0 : i32, i32
  }
  func.func @transform_2(%arg0: i32) -> (i32, i32) {
    %c0_i32 = arith.constant 0 : i32
    %c0_i32_0 = arith.constant 0 : i32
    %c0_i32_1 = arith.constant 0 : i32
    return %c0_i32, %c0_i32_0 : i32, i32
  }
  func.func @transform_3(%arg0: i32) -> (i32, i32) {
    %c0_i32 = arith.constant 0 : i32
    %c0_i32_0 = arith.constant 0 : i32
    return %arg0, %c0_i32 : i32, i32
  }
}

</mosaic_0001>

<llo_original>
// kernel: tpu_custom_call.1
$region0: #{tpu_custom_call.1}
  #allocation0 [shape = 'u32[]', space=smem, size = 0x4, offset = 0x4, fixed_abs, tag = 'smem constant byte address 0x4 - core index']
  #allocation1 [shape = 'u32[144,128]{1,0:T(1,128)}', space=vmem, size = 0x12000, scoped, tag = 'internal scratch']
  %s0 = inlined_call_operand.hbm [shape: f32[16,16], index: 0, kind: input, shape index: {}]
  %s1 = inlined_call_operand.hbm [shape: f32[16,128], index: 1, kind: input, shape index: {}]
  %s2 = inlined_call_operand.vmem [shape: f32[1,128], index: 2, kind: input, shape index: {}]
  %s3 = inlined_call_operand.hbm [shape: f32[16,128], index: 3, kind: output, shape index: {}]
  %s4 = sld [smem:[#allocation0]]
  $region30: #{tpu_custom_call.1} parent=0
    _
  %s6 = ssub.s32 1, %s4
  %s7 = scalar_select 0, %s6, %s4
  $region1: #{tpu_custom_call.1} parent=0
    #allocation2 [shape = 'u8[8192]{0}', space=vmem, size = 0x2000, scoped, tag = 'input window, operand 0, single buffered']
    #allocation3 [shape = 's32[1]{0}', space=sflag, size = 0x4, scoped, tag = 'scoped memory for tpu_custom_call.1']
    #allocation4 [shape = 's32[1]{0}', space=sflag, size = 0x4, scoped, tag = 'scoped memory for tpu_custom_call.1']
    #allocation5 [shape = 'u8[8192]{0}', space=vmem, size = 0x2000, scoped, tag = 'input window, operand 1, single buffered']
    #allocation6 [shape = 's32[1]{0}', space=sflag, size = 0x4, scoped, tag = 'scoped memory for tpu_custom_call.1']
    #allocation7 [shape = 'u8[8192]{0}', space=vmem, size = 0x2000, scoped, tag = 'output window, operand 0, single buffered']
    %8 = vsyncpa [#allocation3], 0
    %9 = vsyncpa [#allocation6], 0
    %10 = vsyncpa [#allocation4], 0
    // Predicated region
    $region2: #{tpu_custom_call.1} parent=1 // pred_check
      _
    $region3: #{tpu_custom_call.1} parent=1 // pred_check_branch
      %12 = sbr.rel (0) target = $region5
    $region4: #{tpu_custom_call.1} parent=1 // pred_region
      %s14 = ssub.s32 256, 256
      %15 = vsyncadd [#allocation3], %s14
      %s16 = sshll.u32 [#allocation2], 4
      %s17 = int_to_ptr.vmem [resolvable:$true] %s16
      %22 = dma.hbm_to_vmem [thread:$0]  %s0, 256, %s17, [#allocation3], 128, 128, 8
    $region5: #{tpu_custom_call.1} parent=1 // pred_fallthru
      _
    // Predicated region
    $region6: #{tpu_custom_call.1} parent=1 // pred_check
      _
    $region7: #{tpu_custom_call.1} parent=1 // pred_check_branch
      %24 = sbr.rel (0) target = $region9
    $region8: #{tpu_custom_call.1} parent=1 // pred_region
      %s26 = ssub.s32 256, 256
      %27 = vsyncadd [#allocation6], %s26
      %s28 = sshll.u32 [#allocation5], 4
      %s29 = int_to_ptr.vmem [resolvable:$true] %s28
      %34 = dma.hbm_to_vmem [thread:$0]  %s1, 256, %s29, [#allocation6], 128, 128, 8
    $region9: #{tpu_custom_call.1} parent=1 // pred_fallthru
      _
    // Predicated region
    $region10: #{tpu_custom_call.1} parent=1 // pred_check
      _
    $region11: #{tpu_custom_call.1} parent=1 // pred_check_branch
      %36 = sbr.rel (0) target = $region13
    $region12: #{tpu_custom_call.1} parent=1 // pred_region
      _
    $region13: #{tpu_custom_call.1} parent=1 // pred_fallthru
      _
    // Predicated region
    $region14: #{tpu_custom_call.1} parent=1 // pred_check
      _
    $region15: #{tpu_custom_call.1} parent=1 // pred_check_branch
      %38 = sbr.rel (0) target = $region17
    $region16: #{tpu_custom_call.1} parent=1 // pred_region
      %39 = dma.done [#allocation3], 256
    $region17: #{tpu_custom_call.1} parent=1 // pred_fallthru
      _
    // Predicated region
    $region18: #{tpu_custom_call.1} parent=1 // pred_check
      _
    $region19: #{tpu_custom_call.1} parent=1 // pred_check_branch
      %41 = sbr.rel (0) target = $region21
    $region20: #{tpu_custom_call.1} parent=1 // pred_region
      %42 = dma.done [#allocation6], 256
    $region21: #{tpu_custom_call.1} parent=1 // pred_fallthru
      _
    %v43 = vld [vmem:[#allocation2] sm:$0xff]
    %v44 = vld [vmem:[#allocation2 + $0x8] sm:$0xff]
    %v45 = vld [vmem:[#allocation5] sm:$0xff]
    %v46 = vld [vmem:[#allocation5 + $0x8] sm:$0xff]
    %v47 = vld [vmem:[%s2] sm:$0x1]
    %v49 = vlaneseq
    %v50 = vshrl.u32 %v49, 7
    %v51 = vsub.s32 0, %v50
    %v52 = vrot.slane %v47, %v51
    %vm54 = vcmask 130048
    %v56 = vsel %vm54, %v43, 0
    %v59 = vsel %vm54, %v44, 0
    %61 = vmatprep.subr.mxu0 0.0
    %62 = vmatpush1.msra.mxu0 %v45
    %63 = vmatprep.subr.mxu0 0.0
    %64 = vmatpush1.msra.mxu0 %v46
    %65 = vmatprep.subr.mxu0 0.0
    %66 = vmatpush1.msra.mxu0 0.0
    %67 = vmatprep.subr.mxu0 0.0
    %68 = vmatpush1.msra.mxu0 0.0
    %69 = vmatprep.subr.mxu0 0.0
    %70 = vmatpush1.msra.mxu0 0.0
    %71 = vmatprep.subr.mxu0 0.0
    %72 = vmatpush1.msra.mxu0 0.0
    %73 = vmatprep.subr.mxu0 0.0
    %74 = vmatpush1.msra.mxu0 0.0
    %75 = vmatprep.subr.mxu0 0.0
    %76 = vmatpush1.msra.mxu0 0.0
    %77 = vmatprep.subr.mxu0 0.0
    %78 = vmatpush1.msra.mxu0 0.0
    %79 = vmatprep.subr.mxu0 0.0
    %80 = vmatpush1.msra.mxu0 0.0
    %81 = vmatprep.subr.mxu0 0.0
    %82 = vmatpush1.msra.mxu0 0.0
    %83 = vmatprep.subr.mxu0 0.0
    %84 = vmatpush1.msra.mxu0 0.0
    %85 = vmatprep.subr.mxu0 0.0
    %86 = vmatpush1.msra.mxu0 0.0
    %87 = vmatprep.subr.mxu0 0.0
    %88 = vmatpush1.msra.mxu0 0.0
    %89 = vmatprep.subr.mxu0 0.0
    %90 = vmatpush1.msra.mxu0 0.0
    %91 = vmatprep.subr.mxu0 0.0
    %92 = vmatpush1.msra.mxu0 0.0
    %93 = vmatprep.subr.mxu0 0.0
    %94 = vmatpush1.msra.mxu0 0.0
    %95 = vmatprep.subr.mxu0 0.0
    %96 = vmatpush1.msra.mxu0 0.0
    %97 = vmatprep.subr.mxu0 0.0
    %98 = vmatpush1.msra.mxu0 0.0
    %99 = vmatprep.subr.mxu0 0.0
    %100 = vmatpush1.msra.mxu0 0.0
    %101 = vmatprep.subr.mxu0 0.0
    %102 = vmatpush1.msra.mxu0 0.0
    %103 = vmatprep.subr.mxu0 0.0
    %104 = vmatpush1.msra.mxu0 0.0
    %105 = vmatprep.subr.mxu0 0.0
    %106 = vmatpush1.msra.mxu0 0.0
    %107 = vmatprep.subr.mxu0 0.0
    %108 = vmatpush1.msra.mxu0 0.0
    %109 = vmatprep.subr.mxu0 0.0
    %110 = vmatpush1.msra.mxu0 0.0
    %111 = vmatprep.subr.mxu0 0.0
    %112 = vmatpush1.msra.mxu0 0.0
    %113 = vmatprep.subr.mxu0 0.0
    %114 = vmatpush1.msra.mxu0 0.0
    %115 = vmatprep.subr.mxu0 0.0
    %116 = vmatpush1.msra.mxu0 0.0
    %117 = vmatprep.subr.mxu0 0.0
    %118 = vmatpush1.msra.mxu0 0.0
    %119 = vmatprep.subr.mxu0 0.0
    %120 = vmatpush1.msra.mxu0 0.0
    %121 = vmatprep.subr.mxu0 0.0
    %122 = vmatpush1.msra.mxu0 0.0
    %123 = vmatprep.subr.mxu0 0.0
    %124 = vmatpush1.msra.mxu0 0.0
    %125 = vmatprep.mubr.f32.mxu0 0.0
    %126 = vmatmul.mubr.f32.gmra.mrb[0].mxu0 %v56
    %v127 = vpop.f32.mrb[0].mxu0
    %v128 = vadd.f32 %v52, %v127
    %v129 = vpop.f32.mrb[0].mxu0
    %130 = vmatprep.mubr.f32.mxu0 0.0
    %131 = vmatmul.mubr.f32.gmra.mrb[0].mxu0 %v59
    %v132 = vpop.f32.mrb[0].mxu0
    %v133 = vadd.f32 %v52, %v132
    %v134 = vpop.f32.mrb[0].mxu0
    %135 = vdwg.mxu0
    %136 = vst [vmem:[#allocation7] sm:$0xff] %v128
    %137 = vst [vmem:[#allocation7 + $0x8] sm:$0xff] %v133
    // Predicated region
    $region22: #{tpu_custom_call.1} parent=1 // pred_check
      _
    $region23: #{tpu_custom_call.1} parent=1 // pred_check_branch
      %139 = sbr.rel (0) target = $region25
    $region24: #{tpu_custom_call.1} parent=1 // pred_region
      %s141 = ssub.s32 256, 256
      %142 = vsyncadd [#allocation4], %s141
      %s143 = sshll.u32 [#allocation7], 4
      %s144 = int_to_ptr.vmem [resolvable:$true] %s143
      %149 = dma.vmem_to_hbm [thread:$0]  %s144, 256, %s3, [#allocation4], 128, 128, 8
    $region25: #{tpu_custom_call.1} parent=1 // pred_fallthru
      _
    // Predicated region
    $region26: #{tpu_custom_call.1} parent=1 // pred_check
      _
    $region27: #{tpu_custom_call.1} parent=1 // pred_check_branch
      %151 = sbr.rel (0) target = $region29
    $region28: #{tpu_custom_call.1} parent=1 // pred_region
      %152 = dma.done [#allocation4], 256
    $region29: #{tpu_custom_call.1} parent=1 // pred_fallthru
      _
    %153 = vsyncpa [#allocation3], 1
    %154 = vsyncpa [#allocation6], 1
    %155 = vsyncpa [#allocation4], 1

</llo_original>
